<compile_context>
chip_gen: v5e
topology: v5e:2x2
jax: 0.10.0
libtpu: 0.0.40
codegen_flags: <defaults>
</compile_context>

<pallas_src>
from functools import partial

import jax
import jax.numpy as jnp
from jax.experimental import pallas as pl
from jax.experimental.pallas import tpu as pltpu


CPAD = 128  # lane-dense channel padding for all matmul N dims


# ----------------------------------------------------------------------------
# Fused Pallas kernel: conv3x3/s2 + ReLU + 1x1 classifier + bilinear upsample
# ----------------------------------------------------------------------------
def _fused_deeplab_kernel(x_ref, w1_ref, b1_ref, w2_ref, b2_ref, r_ref, o_ref,
                          *, ho, wo, cin):
    """Per grid step = one batch element.

    x_ref : (1, 4, Hh, Wh, Cin)  phase-split padded input, phase = 2*(kh%2)+(kw%2)
    w1_ref: (9*Cin, CPAD)        conv weights (HWIO flattened), cols zero-padded
    b1_ref: (1, CPAD)
    w2_ref: (CPAD, CPAD)         1x1 classifier weights, zero-padded both dims
    b2_ref: (1, CPAD)
    r_ref : (H*W, Ho*Wo)         kron(rh, rw) bilinear interpolation matrix
    o_ref : (1, H*W, CPAD)       lane-dense output block
    """
    x = x_ref[...]  # (1, 4, Hh, Wh, Cin) -- tiny, load once

    # In-VMEM im2col: each 3x3 tap of the stride-2 conv is a contiguous static
    # slice of one even/odd phase plane (no strided loads, no HBM inflation).
    taps = []
    for kh in range(3):
        for kw in range(3):
            ph = (kh % 2) * 2 + (kw % 2)
            dh, dw = kh // 2, kw // 2
            taps.append(x[0, ph, dh:dh + ho, dw:dw + wo, :])       # (Ho, Wo, Cin)
    patches = jnp.concatenate(taps, axis=-1)                       # (Ho, Wo, 9*Cin)
    patches = patches.reshape(ho * wo, 9 * cin)                    # (Ho*Wo, 9*Cin)

    # backbone conv + bias + ReLU (feature tile stays in vregs/VMEM)
    feat = jnp.dot(patches, w1_ref[...], preferred_element_type=jnp.float32)
    feat = jnp.maximum(feat + b1_ref[...], 0.0)                    # (Ho*Wo, CPAD)

    # 1x1 classifier (fused, no HBM roundtrip of the features)
    logits = jnp.dot(feat, w2_ref[...], preferred_element_type=jnp.float32)
    logits = logits + b2_ref[...]                                  # (Ho*Wo, CPAD)

    # bilinear upsample = one matmul with kron(rh, rw): no transposes, lane-dense
    up = jnp.dot(r_ref[...], logits, preferred_element_type=jnp.float32)
    o_ref[0] = up.astype(o_ref.dtype)                              # (H*W, CPAD)


# ----------------------------------------------------------------------------
# JAX glue (layout plumbing only -- no data duplication)
# ----------------------------------------------------------------------------
def _bilinear_matrix(out_size, in_size, dtype=jnp.float32):
    """PyTorch F.interpolate(mode='bilinear', align_corners=False) row weights."""
    scale = in_size / out_size
    i = jnp.arange(out_size, dtype=jnp.float32)
    src = (i + 0.5) * scale - 0.5
    src = jnp.maximum(src, 0.0)
    i0 = jnp.minimum(jnp.floor(src).astype(jnp.int32), in_size - 1)
    i1 = jnp.minimum(i0 + 1, in_size - 1)
    lam = src - i0.astype(jnp.float32)
    return (jax.nn.one_hot(i0, in_size, dtype=dtype) * (1.0 - lam)[:, None]
            + jax.nn.one_hot(i1, in_size, dtype=dtype) * lam[:, None])


def init_params(key, cin=4, cmid=8, num_classes=3):
    k1, k2, k3, k4 = jax.random.split(key, 4)
    return {
        "backbone_w": jax.random.normal(k1, (3, 3, cin, cmid), jnp.float32) * 0.1,
        "backbone_b": jax.random.normal(k2, (cmid,), jnp.float32) * 0.05,
        "cls_w": jax.random.normal(k3, (cmid, num_classes), jnp.float32) * 0.1,
        "cls_b": jax.random.normal(k4, (num_classes,), jnp.float32) * 0.05,
    }


def deeplabv3_forward(x_nchw, params):
    N, Cin, H, W = x_nchw.shape
    # PyTorch conv output size for k=3, s=2, p=1 (handles odd dims too)
    Ho = (H - 1) // 2 + 1
    Wo = (W - 1) // 2 + 1
    Cmid = params["backbone_w"].shape[-1]
    ncls = params["cls_w"].shape[-1]

    # ---- input: pad (+ round up to even) + even/odd phase split (space-to-depth,
    # no duplication; the extra zero row/col for odd dims is never read) ----------
    x_nhwc = jnp.transpose(x_nchw, (0, 2, 3, 1))
    xp = jnp.pad(x_nhwc, ((0, 0), (1, 1 + (H % 2)), (1, 1 + (W % 2)), (0, 0)))
    Hp, Wp = xp.shape[1], xp.shape[2]                               # both even
    Hh, Wh = Hp // 2, Wp // 2
    x_ph = xp.reshape(N, Hh, 2, Wh, 2, Cin).transpose(0, 2, 4, 1, 3, 5)
    x_ph = x_ph.reshape(N, 4, Hh, Wh, Cin)                          # phase = 2*ph_h+ph_w

    # ---- weights: zero-pad channel dims to 128 for lane-dense MXU / stores ----
    w1p = jnp.pad(params["backbone_w"].reshape(9 * Cin, Cmid),
                  ((0, 0), (0, CPAD - Cmid)))                       # (9*Cin, 128)
    b1p = jnp.pad(params["backbone_b"], (0, CPAD - Cmid)).reshape(1, CPAD)
    w2p = jnp.pad(params["cls_w"], ((0, CPAD - Cmid), (0, CPAD - ncls)))  # (128, 128)
    b2p = jnp.pad(params["cls_b"], (0, CPAD - ncls)).reshape(1, CPAD)

    # ---- bilinear interpolation as one Kronecker matrix (per-image matmul) ----
    rh = _bilinear_matrix(H, Ho)                                    # (H, Ho)
    rw = _bilinear_matrix(W, Wo)                                    # (W, Wo)
    r_kron = jnp.kron(rh, rw)                                       # (H*W, Ho*Wo)

    kernel = partial(_fused_deeplab_kernel, ho=Ho, wo=Wo, cin=Cin)
    out_pad = pl.pallas_call(
        kernel,
        out_shape=jax.ShapeDtypeStruct((N, H * W, CPAD), jnp.float32),
        grid=(N,),
        in_specs=[
            pl.BlockSpec((1, 4, Hh, Wh, Cin), lambda n: (n, 0, 0, 0, 0)),
            pl.BlockSpec((9 * Cin, CPAD), lambda n: (0, 0)),
            pl.BlockSpec((1, CPAD), lambda n: (0, 0)),
            pl.BlockSpec((CPAD, CPAD), lambda n: (0, 0)),
            pl.BlockSpec((1, CPAD), lambda n: (0, 0)),
            pl.BlockSpec((H * W, Ho * Wo), lambda n: (0, 0)),
        ],
        out_specs=pl.BlockSpec((1, H * W, CPAD), lambda n: (n, 0, 0)),
        compiler_params=pltpu.CompilerParams(
            dimension_semantics=("parallel",)),
    )(x_ph, w1p, b1p, w2p, b2p, r_kron)

    # slice real classes out of the lane-padded output, back to NCHW
    out = out_pad[:, :, :ncls].reshape(N, H, W, ncls)
    return out.transpose(0, 3, 1, 2)


# ----------------------------------------------------------------------------
# Pure-JAX reference (for correctness check)
# ----------------------------------------------------------------------------
def _reference(x_nchw, params):
    x_nhwc = jnp.transpose(x_nchw, (0, 2, 3, 1))
    conv = jax.lax.conv_general_dilated(
        x_nhwc, params["backbone_w"], window_strides=(2, 2),
        padding=((1, 1), (1, 1)), dimension_numbers=("NHWC", "HWIO", "NHWC"))
    feat = jnp.maximum(conv + params["backbone_b"], 0.0)
    logits = jnp.einsum("nhwc,ck->nhwk", feat, params["cls_w"]) + params["cls_b"]
    logits = logits.transpose(0, 3, 1, 2)                           # NCHW
    H, W = x_nchw.shape[-2:]
    rh = _bilinear_matrix(H, logits.shape[2])
    rw = _bilinear_matrix(W, logits.shape[3])
    return jnp.einsum("oh,pw,nchw->ncop", rh, rw, logits)


# ----------------------------------------------------------------------------
if __name__ == "__main__":
    key = jax.random.PRNGKey(0)
    kp, kx = jax.random.split(key)
    params = init_params(kp, cin=4, cmid=8, num_classes=3)
    x = jax.random.normal(kx, (2, 4, 16, 16), jnp.float32)   # NCHW, like PyTorch

    fwd = jax.jit(deeplabv3_forward)
    out = jax.block_until_ready(fwd(x, params))
    assert out.shape == (2, 3, 16, 16), out.shape

    ref = jax.block_until_ready(_reference(x, params))
    assert jnp.allclose(out, ref, atol=2e-3, rtol=2e-3), float(jnp.abs(out - ref).max())

    print("KERNEL_OK")
</pallas_src>

<mosaic_0001>
module attributes {stable_mosaic.version = 11 : i64} {
  func.func @_fused_deeplab_kernel(%arg0: i32, %arg1: memref<1x4x9x9x4xf32, #tpu.memory_space<vmem>>, %arg2: memref<36x128xf32, #tpu.memory_space<vmem>>, %arg3: memref<1x128xf32, #tpu.memory_space<vmem>>, %arg4: memref<128x128xf32, #tpu.memory_space<vmem>>, %arg5: memref<1x128xf32, #tpu.memory_space<vmem>>, %arg6: memref<256x64xf32, #tpu.memory_space<vmem>>, %arg7: memref<1x256x128xf32, #tpu.memory_space<vmem>>) attributes {dimension_semantics = [#tpu.dimension_semantics<parallel>], iteration_bounds = array<i64: 2>, scalar_prefetch = 0 : i64, scratch_operands = 0 : i64, tpu.core_type = #tpu.core_type<tc>, window_params = [{transform_indices = @transform_0, window_bounds = array<i64: 1, 4, 9, 9, 4>}, {pipeline_mode = #tpu.pipeline_mode<synchronous>, transform_indices = @transform_1, window_bounds = array<i64: 36, 128>}, {pipeline_mode = #tpu.pipeline_mode<synchronous>, transform_indices = @transform_2, window_bounds = array<i64: 1, 128>}, {pipeline_mode = #tpu.pipeline_mode<synchronous>, transform_indices = @transform_3, window_bounds = array<i64: 128, 128>}, {pipeline_mode = #tpu.pipeline_mode<synchronous>, transform_indices = @transform_4, window_bounds = array<i64: 1, 128>}, {pipeline_mode = #tpu.pipeline_mode<synchronous>, transform_indices = @transform_5, window_bounds = array<i64: 256, 64>}, {transform_indices = @transform_6, window_bounds = array<i64: 1, 256, 128>}]} {
    %c0 = arith.constant 0 : index
    %c0_0 = arith.constant 0 : index
    %c0_1 = arith.constant 0 : index
    %c0_2 = arith.constant 0 : index
    %c0_3 = arith.constant 0 : index
    %0 = vector.load %arg1[%c0, %c0_0, %c0_1, %c0_2, %c0_3] : memref<1x4x9x9x4xf32, #tpu.memory_space<vmem>>, vector<1x4x9x9x4xf32>
    %1 = vector.extract_strided_slice %0 {offsets = [0, 0, 0, 0, 0], sizes = [1, 1, 8, 8, 4], strides = [1, 1, 1, 1, 1]} : vector<1x4x9x9x4xf32> to vector<1x1x8x8x4xf32>
    %2 = vector.shape_cast %1 : vector<1x1x8x8x4xf32> to vector<8x8x4xf32>
    %3 = vector.extract_strided_slice %0 {offsets = [0, 1, 0, 0, 0], sizes = [1, 1, 8, 8, 4], strides = [1, 1, 1, 1, 1]} : vector<1x4x9x9x4xf32> to vector<1x1x8x8x4xf32>
    %4 = vector.shape_cast %3 : vector<1x1x8x8x4xf32> to vector<8x8x4xf32>
    %5 = vector.extract_strided_slice %0 {offsets = [0, 0, 0, 1, 0], sizes = [1, 1, 8, 8, 4], strides = [1, 1, 1, 1, 1]} : vector<1x4x9x9x4xf32> to vector<1x1x8x8x4xf32>
    %6 = vector.shape_cast %5 : vector<1x1x8x8x4xf32> to vector<8x8x4xf32>
    %7 = vector.extract_strided_slice %0 {offsets = [0, 2, 0, 0, 0], sizes = [1, 1, 8, 8, 4], strides = [1, 1, 1, 1, 1]} : vector<1x4x9x9x4xf32> to vector<1x1x8x8x4xf32>
    %8 = vector.shape_cast %7 : vector<1x1x8x8x4xf32> to vector<8x8x4xf32>
    %9 = vector.extract_strided_slice %0 {offsets = [0, 3, 0, 0, 0], sizes = [1, 1, 8, 8, 4], strides = [1, 1, 1, 1, 1]} : vector<1x4x9x9x4xf32> to vector<1x1x8x8x4xf32>
    %10 = vector.shape_cast %9 : vector<1x1x8x8x4xf32> to vector<8x8x4xf32>
    %11 = vector.extract_strided_slice %0 {offsets = [0, 2, 0, 1, 0], sizes = [1, 1, 8, 8, 4], strides = [1, 1, 1, 1, 1]} : vector<1x4x9x9x4xf32> to vector<1x1x8x8x4xf32>
    %12 = vector.shape_cast %11 : vector<1x1x8x8x4xf32> to vector<8x8x4xf32>
    %13 = vector.extract_strided_slice %0 {offsets = [0, 0, 1, 0, 0], sizes = [1, 1, 8, 8, 4], strides = [1, 1, 1, 1, 1]} : vector<1x4x9x9x4xf32> to vector<1x1x8x8x4xf32>
    %14 = vector.shape_cast %13 : vector<1x1x8x8x4xf32> to vector<8x8x4xf32>
    %15 = vector.extract_strided_slice %0 {offsets = [0, 1, 1, 0, 0], sizes = [1, 1, 8, 8, 4], strides = [1, 1, 1, 1, 1]} : vector<1x4x9x9x4xf32> to vector<1x1x8x8x4xf32>
    %16 = vector.shape_cast %15 : vector<1x1x8x8x4xf32> to vector<8x8x4xf32>
    %17 = vector.extract_strided_slice %0 {offsets = [0, 0, 1, 1, 0], sizes = [1, 1, 8, 8, 4], strides = [1, 1, 1, 1, 1]} : vector<1x4x9x9x4xf32> to vector<1x1x8x8x4xf32>
    %18 = vector.shape_cast %17 : vector<1x1x8x8x4xf32> to vector<8x8x4xf32>
    %19 = tpu.concatenate %2, %4, %6, %8, %10, %12, %14, %16, %18 in 2 : vector<8x8x4xf32>, vector<8x8x4xf32>, vector<8x8x4xf32>, vector<8x8x4xf32>, vector<8x8x4xf32>, vector<8x8x4xf32>, vector<8x8x4xf32>, vector<8x8x4xf32>, vector<8x8x4xf32> -> vector<8x8x36xf32>
    %20 = vector.shape_cast %19 : vector<8x8x36xf32> to vector<64x36xf32>
    %c0_4 = arith.constant 0 : index
    %c0_5 = arith.constant 0 : index
    %21 = vector.load %arg2[%c0_4, %c0_5] : memref<36x128xf32, #tpu.memory_space<vmem>>, vector<36x128xf32>
    %cst = arith.constant dense<0.000000e+00> : vector<64x128xf32>
    %22 = tpu.matmul %20, %21, %cst {dimension_numbers = #tpu.dot_dimension_numbers<[1], [0], [0], [1], [0, 0, 1, 1], [], []>} : vector<64x36xf32>, vector<36x128xf32>, vector<64x128xf32> -> vector<64x128xf32>
    %c0_6 = arith.constant 0 : index
    %c0_7 = arith.constant 0 : index
    %23 = vector.load %arg3[%c0_6, %c0_7] : memref<1x128xf32, #tpu.memory_space<vmem>>, vector<1x128xf32>
    %24 = vector.broadcast %23 : vector<1x128xf32> to vector<64x128xf32>
    %25 = arith.addf %22, %24 : vector<64x128xf32>
    %cst_8 = arith.constant 0.000000e+00 : f32
    %26 = vector.broadcast %cst_8 : f32 to vector<64x128xf32>
    %27 = arith.maximumf %25, %26 : vector<64x128xf32>
    %c0_9 = arith.constant 0 : index
    %c0_10 = arith.constant 0 : index
    %28 = vector.load %arg4[%c0_9, %c0_10] : memref<128x128xf32, #tpu.memory_space<vmem>>, vector<128x128xf32>
    %cst_11 = arith.constant dense<0.000000e+00> : vector<64x128xf32>
    %29 = tpu.matmul %27, %28, %cst_11 {dimension_numbers = #tpu.dot_dimension_numbers<[1], [0], [0], [1], [0, 0, 1, 1], [], []>} : vector<64x128xf32>, vector<128x128xf32>, vector<64x128xf32> -> vector<64x128xf32>
    %c0_12 = arith.constant 0 : index
    %c0_13 = arith.constant 0 : index
    %30 = vector.load %arg5[%c0_12, %c0_13] : memref<1x128xf32, #tpu.memory_space<vmem>>, vector<1x128xf32>
    %31 = vector.broadcast %30 : vector<1x128xf32> to vector<64x128xf32>
    %32 = arith.addf %29, %31 : vector<64x128xf32>
    %c0_14 = arith.constant 0 : index
    %c0_15 = arith.constant 0 : index
    %33 = vector.load %arg6[%c0_14, %c0_15] : memref<256x64xf32, #tpu.memory_space<vmem>>, vector<256x64xf32>
    %cst_16 = arith.constant dense<0.000000e+00> : vector<256x128xf32>
    %34 = tpu.matmul %33, %32, %cst_16 {dimension_numbers = #tpu.dot_dimension_numbers<[1], [0], [0], [1], [0, 0, 1, 1], [], []>} : vector<256x64xf32>, vector<64x128xf32>, vector<256x128xf32> -> vector<256x128xf32>
    %c0_17 = arith.constant 0 : index
    %c0_18 = arith.constant 0 : index
    %c0_19 = arith.constant 0 : index
    %35 = vector.load %arg7[%c0_17, %c0_18, %c0_19] : memref<1x256x128xf32, #tpu.memory_space<vmem>>, vector<1x256x128xf32>
    %36 = vector.shape_cast %35 : vector<1x256x128xf32> to vector<256x128xf32>
    %37 = vector.shape_cast %34 : vector<256x128xf32> to vector<1x256x128xf32>
    tpu.vector_store %arg7[%c0_17, %c0_18, %c0_19], %37 {strides = array<i32>} : memref<1x256x128xf32, #tpu.memory_space<vmem>>, vector<1x256x128xf32>,
    return
  }
  func.func @transform_0(%arg0: i32) -> (i32, i32, i32, i32, i32) {
    %c0_i32 = arith.constant 0 : i32
    %c0_i32_0 = arith.constant 0 : i32
    %c0_i32_1 = arith.constant 0 : i32
    %c0_i32_2 = arith.constant 0 : i32
    %c0_i32_3 = arith.constant 0 : i32
    return %arg0, %c0_i32, %c0_i32_0, %c0_i32_1, %c0_i32_2 : i32, i32, i32, i32, i32
  }
  func.func @transform_1(%arg0: i32) -> (i32, i32) {
    %c0_i32 = arith.constant 0 : i32
    %c0_i32_0 = arith.constant 0 : i32
    %c0_i32_1 = arith.constant 0 : i32
    return %c0_i32, %c0_i32_0 : i32, i32
  }
  func.func @transform_2(%arg0: i32) -> (i32, i32) {
    %c0_i32 = arith.constant 0 : i32
    %c0_i32_0 = arith.constant 0 : i32
    %c0_i32_1 = arith.constant 0 : i32
    return %c0_i32, %c0_i32_0 : i32, i32
  }
  func.func @transform_3(%arg0: i32) -> (i32, i32) {
    %c0_i32 = arith.constant 0 : i32
    %c0_i32_0 = arith.constant 0 : i32
    %c0_i32_1 = arith.constant 0 : i32
    return %c0_i32, %c0_i32_0 : i32, i32
  }
  func.func @transform_4(%arg0: i32) -> (i32, i32) {
    %c0_i32 = arith.constant 0 : i32
    %c0_i32_0 = arith.constant 0 : i32
    %c0_i32_1 = arith.constant 0 : i32
    return %c0_i32, %c0_i32_0 : i32, i32
  }
  func.func @transform_5(%arg0: i32) -> (i32, i32) {
    %c0_i32 = arith.constant 0 : i32
    %c0_i32_0 = arith.constant 0 : i32
    %c0_i32_1 = arith.constant 0 : i32
    return %c0_i32, %c0_i32_0 : i32, i32
  }
  func.func @transform_6(%arg0: i32) -> (i32, i32, i32) {
    %c0_i32 = arith.constant 0 : i32
    %c0_i32_0 = arith.constant 0 : i32
    %c0_i32_1 = arith.constant 0 : i32
    return %arg0, %c0_i32, %c0_i32_0 : i32, i32, i32
  }
}

</mosaic_0001>

<llo_original>
// kernel: deeplabv3_forward.1
$region0: #{deeplabv3_forward.1}
  #allocation0 [shape = 'u32[]', space=smem, size = 0x4, offset = 0x4, fixed_abs, tag = 'smem constant byte address 0x4 - core index']
  #allocation1 [shape = 'u32[72,128]{1,0:T(1,128)}', space=vmem, size = 0x9000, scoped, tag = 'internal scratch']
  %s0 = inlined_call_operand.vmem [shape: f32[2,4,9,9,4], index: 0, kind: input, shape index: {}]
  %s1 = inlined_call_operand.vmem [shape: f32[36,128], index: 1, kind: input, shape index: {}]
  %s2 = inlined_call_operand.vmem [shape: f32[1,128], index: 2, kind: input, shape index: {}]
  %s3 = inlined_call_operand.vmem [shape: f32[128,128], index: 3, kind: input, shape index: {}]
  %s4 = inlined_call_operand.vmem [shape: f32[1,128], index: 4, kind: input, shape index: {}]
  %s5 = inlined_call_operand.vmem [shape: f32[256,64], index: 5, kind: input, shape index: {}]
  %s6 = inlined_call_operand.vmem [shape: f32[2,256,128], index: 6, kind: output, shape index: {}]
  %s7 = sld [smem:[#allocation0]]
  $region57: #{deeplabv3_forward.1} parent=0
    _
  %s9 = ssub.s32 1, %s7
  %s10 = scalar_select 0, %s9, %s7
  loop: start=0, step=1, limit=4
  $region2: #{deeplabv3_forward.1} parent=0 // loop_pre_header
    _
  $region3: #{deeplabv3_forward.1} parent=0 // loop_header
    %s12 = sphi 0, %s16
    %p13 = scmp.ge.s32.totalorder %s12, 4
    %s22 = sphi 0, %s24
    %s25 = sphi 0, %s22
    %s26 = sphi 0, %s25
    %s42 = sphi 0, %s26
    %s46 = sphi 0, %s46
    %s48 = sphi 0, %s46
    %s49 = sphi 0, %s48
    %s63 = sphi 0, %s49
    %s67 = sphi 0, %s67
    %s69 = sphi 0, %s67
    %s70 = sphi 0, %s69
    %s84 = sphi 0, %s70
    %s88 = sphi 0, %s88
    %s90 = sphi 0, %s88
    %s91 = sphi 0, %s90
    %s105 = sphi 0, %s91
    %s109 = sphi 0, %s109
    %s111 = sphi 0, %s109
    %s112 = sphi 0, %s111
    %s126 = sphi 0, %s112
    %s130 = sphi 0, %s130
    %s132 = sphi 0, %s130
    %s133 = sphi 0, %s132
    %s147 = sphi 0, %s133
    %s153 = sphi 0, %s155
    %s156 = sphi 0, %s153
    %s157 = sphi 0, %s156
    %s173 = sphi 0, %s157
  $region4: #{deeplabv3_forward.1} parent=0 // loop_header_branch
    %15 = sbr.rel (%p13) target = $region8
  $region5: #{deeplabv3_forward.1} parent=0 // loop_body
    %s17 = ssub.s32 %s12, 1
    %s18 = ssub.s32 %s12, 2
    %s19 = sadd.s32 %s12, 1
    %s20 = ssub.s32 %s12, %s19
    %p21 = scmp.eq.s32.totalorder %s20, 0
    %s23 = sadd.s32 %s22, 1
    %s24 = scalar_select %p21, %s22, %s23
    %p27 = pneg %p21
    %p28 = scmp.eq.s32.totalorder %s12, 1
    %p29 = por %p27, %p28
    %p30 = scmp.ne.s32.totalorder %s22, %s25
    %p31 = scmp.eq.s32.totalorder %s12, 0
    %p32 = por %p30, %p31
    %p33 = scmp.ne.s32.totalorder %s22, %s25
    %p34 = scmp.eq.s32.totalorder %s17, 1
    %p35 = por %p33, %p34
    %p36 = scmp.ne.s32.totalorder %s25, %s26
    %p37 = scmp.eq.s32.totalorder %s17, 0
    %p38 = por %p36, %p37
    %p39 = scmp.ne.s32.totalorder %s25, %s26
    %p40 = scmp.eq.s32.totalorder %s18, 1
    %p41 = por %p39, %p40
    %p43 = scmp.ne.s32.totalorder %s26, %s42
    %p44 = scmp.eq.s32.totalorder %s18, 0
    %p45 = por %p43, %p44
    %s47 = sadd.s32 %s46, 1
    %p50 = scmp.eq.s32.totalorder %s12, 1
    %p51 = scmp.ne.s32.totalorder %s46, %s48
    %p52 = scmp.eq.s32.totalorder %s12, 0
    %p53 = por %p51, %p52
    %p54 = scmp.ne.s32.totalorder %s46, %s48
    %p55 = scmp.eq.s32.totalorder %s17, 1
    %p56 = por %p54, %p55
    %p57 = scmp.ne.s32.totalorder %s48, %s49
    %p58 = scmp.eq.s32.totalorder %s17, 0
    %p59 = por %p57, %p58
    %p60 = scmp.ne.s32.totalorder %s48, %s49
    %p61 = scmp.eq.s32.totalorder %s18, 1
    %p62 = por %p60, %p61
    %p64 = scmp.ne.s32.totalorder %s49, %s63
    %p65 = scmp.eq.s32.totalorder %s18, 0
    %p66 = por %p64, %p65
    %s68 = sadd.s32 %s67, 1
    %p71 = scmp.eq.s32.totalorder %s12, 1
    %p72 = scmp.ne.s32.totalorder %s67, %s69
    %p73 = scmp.eq.s32.totalorder %s12, 0
    %p74 = por %p72, %p73
    %p75 = scmp.ne.s32.totalorder %s67, %s69
    %p76 = scmp.eq.s32.totalorder %s17, 1
    %p77 = por %p75, %p76
    %p78 = scmp.ne.s32.totalorder %s69, %s70
    %p79 = scmp.eq.s32.totalorder %s17, 0
    %p80 = por %p78, %p79
    %p81 = scmp.ne.s32.totalorder %s69, %s70
    %p82 = scmp.eq.s32.totalorder %s18, 1
    %p83 = por %p81, %p82
    %p85 = scmp.ne.s32.totalorder %s70, %s84
    %p86 = scmp.eq.s32.totalorder %s18, 0
    %p87 = por %p85, %p86
    %s89 = sadd.s32 %s88, 1
    %p92 = scmp.eq.s32.totalorder %s12, 1
    %p93 = scmp.ne.s32.totalorder %s88, %s90
    %p94 = scmp.eq.s32.totalorder %s12, 0
    %p95 = por %p93, %p94
    %p96 = scmp.ne.s32.totalorder %s88, %s90
    %p97 = scmp.eq.s32.totalorder %s17, 1
    %p98 = por %p96, %p97
    %p99 = scmp.ne.s32.totalorder %s90, %s91
    %p100 = scmp.eq.s32.totalorder %s17, 0
    %p101 = por %p99, %p100
    %p102 = scmp.ne.s32.totalorder %s90, %s91
    %p103 = scmp.eq.s32.totalorder %s18, 1
    %p104 = por %p102, %p103
    %p106 = scmp.ne.s32.totalorder %s91, %s105
    %p107 = scmp.eq.s32.totalorder %s18, 0
    %p108 = por %p106, %p107
    %s110 = sadd.s32 %s109, 1
    %p113 = scmp.eq.s32.totalorder %s12, 1
    %p114 = scmp.ne.s32.totalorder %s109, %s111
    %p115 = scmp.eq.s32.totalorder %s12, 0
    %p116 = por %p114, %p115
    %p117 = scmp.ne.s32.totalorder %s109, %s111
    %p118 = scmp.eq.s32.totalorder %s17, 1
    %p119 = por %p117, %p118
    %p120 = scmp.ne.s32.totalorder %s111, %s112
    %p121 = scmp.eq.s32.totalorder %s17, 0
    %p122 = por %p120, %p121
    %p123 = scmp.ne.s32.totalorder %s111, %s112
    %p124 = scmp.eq.s32.totalorder %s18, 1
    %p125 = por %p123, %p124
    %p127 = scmp.ne.s32.totalorder %s112, %s126
    %p128 = scmp.eq.s32.totalorder %s18, 0
    %p129 = por %p127, %p128
    %s131 = sadd.s32 %s130, 1
    %p134 = scmp.eq.s32.totalorder %s12, 1
    %p135 = scmp.ne.s32.totalorder %s130, %s132
    %p136 = scmp.eq.s32.totalorder %s12, 0
    %p137 = por %p135, %p136
    %p138 = scmp.ne.s32.totalorder %s130, %s132
    %p139 = scmp.eq.s32.totalorder %s17, 1
    %p140 = por %p138, %p139
    %p141 = scmp.ne.s32.totalorder %s132, %s133
    %p142 = scmp.eq.s32.totalorder %s17, 0
    %p143 = por %p141, %p142
    %p144 = scmp.ne.s32.totalorder %s132, %s133
    %p145 = scmp.eq.s32.totalorder %s18, 1
    %p146 = por %p144, %p145
    %p148 = scmp.ne.s32.totalorder %s133, %s147
    %p149 = scmp.eq.s32.totalorder %s18, 0
    %p150 = por %p148, %p149
    %s151 = ssub.s32 %s12, %s19
    %p152 = scmp.eq.s32.totalorder %s151, 0
    %s154 = sadd.s32 %s153, 1
    %s155 = scalar_select %p152, %s153, %s154
    %p158 = pneg %p152
    %p159 = scmp.eq.s32.totalorder %s12, 1
    %p160 = por %p158, %p159
    %p161 = scmp.ne.s32.totalorder %s153, %s156
    %p162 = scmp.eq.s32.totalorder %s12, 0
    %p163 = por %p161, %p162
    %p164 = scmp.ne.s32.totalorder %s153, %s156
    %p165 = scmp.eq.s32.totalorder %s17, 1
    %p166 = por %p164, %p165
    %p167 = scmp.ne.s32.totalorder %s156, %s157
    %p168 = scmp.eq.s32.totalorder %s17, 0
    %p169 = por %p167, %p168
    %p170 = scmp.ne.s32.totalorder %s156, %s157
    %p171 = scmp.eq.s32.totalorder %s18, 1
    %p172 = por %p170, %p171
    %p174 = scmp.ne.s32.totalorder %s157, %s173
    %p175 = scmp.eq.s32.totalorder %s18, 0
    %p176 = por %p174, %p175
    %p177 = scmp.le.s32.totalorder 1, %s12
    %p178 = scmp.lt.s32.totalorder %s12, 3
    %p179 = pnand %p177, %p178
    %p180 = pneg %p179
    // Predicated region
    $region9: #{deeplabv3_forward.1} parent=5 // pred_check
      _
    $region10: #{deeplabv3_forward.1} parent=5 // pred_check_branch
      %182 = sbr.rel (%p179) target = $region12
    $region11: #{deeplabv3_forward.1} parent=5 // pred_region
      %s183 = ssub.s32 %s12, 1
      // Predicated region
      $region13: #{deeplabv3_forward.1} parent=11 // pred_check
        %p184 = pneg %p59
      $region14: #{deeplabv3_forward.1} parent=11 // pred_check_branch
        %186 = sbr.rel (%p184) target = $region16
      $region15: #{deeplabv3_forward.1} parent=11 // pred_region
        _
      $region16: #{deeplabv3_forward.1} parent=11 // pred_fallthru
        _
      // Predicated region
      $region17: #{deeplabv3_forward.1} parent=11 // pred_check
        %p187 = pneg %p80
      $region18: #{deeplabv3_forward.1} parent=11 // pred_check_branch
        %189 = sbr.rel (%p187) target = $region20
      $region19: #{deeplabv3_forward.1} parent=11 // pred_region
        _
      $region20: #{deeplabv3_forward.1} parent=11 // pred_fallthru
        _
      // Predicated region
      $region21: #{deeplabv3_forward.1} parent=11 // pred_check
        %p190 = pneg %p101
      $region22: #{deeplabv3_forward.1} parent=11 // pred_check_branch
        %192 = sbr.rel (%p190) target = $region24
      $region23: #{deeplabv3_forward.1} parent=11 // pred_region
        _
      $region24: #{deeplabv3_forward.1} parent=11 // pred_fallthru
        _
      // Predicated region
      $region25: #{deeplabv3_forward.1} parent=11 // pred_check
        %p193 = pneg %p122
      $region26: #{deeplabv3_forward.1} parent=11 // pred_check_branch
        %195 = sbr.rel (%p193) target = $region28
      $region27: #{deeplabv3_forward.1} parent=11 // pred_region
        _
      $region28: #{deeplabv3_forward.1} parent=11 // pred_fallthru
        _
      // Predicated region
      $region29: #{deeplabv3_forward.1} parent=11 // pred_check
        %p196 = pneg %p143
      $region30: #{deeplabv3_forward.1} parent=11 // pred_check_branch
        %198 = sbr.rel (%p196) target = $region32
      $region31: #{deeplabv3_forward.1} parent=11 // pred_region
        _
      $region32: #{deeplabv3_forward.1} parent=11 // pred_fallthru
        _
    $region12: #{deeplabv3_forward.1} parent=5 // pred_fallthru
      _
    %p199 = scmp.lt.s32.totalorder %s12, 2
    // Predicated region
    $region33: #{deeplabv3_forward.1} parent=5 // pred_check
      %p200 = pneg %p199
    $region34: #{deeplabv3_forward.1} parent=5 // pred_check_branch
      %202 = sbr.rel (%p200) target = $region36
    $region35: #{deeplabv3_forward.1} parent=5 // pred_region
      // Predicated region
      $region37: #{deeplabv3_forward.1} parent=35 // pred_check
        %p203 = pneg %p32
      $region38: #{deeplabv3_forward.1} parent=35 // pred_check_branch
        %205 = sbr.rel (%p203) target = $region40
      $region39: #{deeplabv3_forward.1} parent=35 // pred_region
        %p206 = scmp.lt.s32.totalorder %s12, 1
        %s207 = scalar_select %p206, %s12, 1
        %s208 = smul.addr %s207, 72
        %s209 = smul.addr %s208, 8
        %s210 = scalar_lea.vmem %s0, %s209
      $region40: #{deeplabv3_forward.1} parent=35 // pred_fallthru
        _
    $region36: #{deeplabv3_forward.1} parent=5 // pred_fallthru
      _
    %p211 = scmp.le.s32.totalorder 1, %s12
    %p212 = scmp.lt.s32.totalorder %s12, 3
    %p213 = pnand %p211, %p212
    %p214 = pneg %p213
    // Predicated region
    $region41: #{deeplabv3_forward.1} parent=5 // pred_check
      _
    $region42: #{deeplabv3_forward.1} parent=5 // pred_check_branch
      %216 = sbr.rel (%p213) target = $region44
    $region43: #{deeplabv3_forward.1} parent=5 // pred_region
      %s217 = ssub.s32 %s12, 1
      %p218 = scmp.lt.s32.totalorder %s17, 1
      %s219 = scalar_select %p218, %s17, 1
      %s220 = smul.addr %s219, 72
      %s221 = smul.addr %s220, 8
      %s222 = scalar_lea.vmem %s0, %s221
      %p223 = pneg %p38
      %p224 = pneg %p35
      %p225 = pneg %p59
      %p226 = pneg %p56
      %p227 = pneg %p80
      %p228 = pneg %p77
      %p229 = pneg %p101
      %p230 = pneg %p98
      %p231 = pneg %p122
      %p232 = pneg %p119
      %p233 = pneg %p143
      %p234 = pneg %p140
      %p235 = pneg %p169
      %p236 = pneg %p166
      %p237 = scmp.lt.s32.totalorder %s17, 1
      %s238 = scalar_select %p237, %s17, 1
      %s239 = smul.addr %s238, 32
      %s240 = smul.addr %s239, 8
      %s241 = scalar_lea.vmem %s6, %s240
      %p242 = scmp.lt.s32.totalorder %s17, 1
      %s243 = scalar_select %p242, %s17, 1
      %s244 = smul.addr %s243, 72
      %s245 = smul.addr %s244, 8
      %s246 = scalar_lea.vmem %s0, %s245
      %p247 = scmp.lt.s32.totalorder %s17, 1
      %s248 = scalar_select %p247, %s17, 1
      %s249 = smul.addr %s248, 32
      %s250 = smul.addr %s249, 8
      %s251 = scalar_lea.vmem %s6, %s250
      %v252 = vld [vmem:[%s246] sm:$0xff]
      %v253 = vld [vmem:[%s246 + $0x8] sm:$0x1]
      %v254 = vld [vmem:[%s246 + $0x10] sm:$0xff]
      %v255 = vld [vmem:[%s246 + $0x18] sm:$0x1]
      %v256 = vld [vmem:[%s246 + $0x20] sm:$0xff]
      %v257 = vld [vmem:[%s246 + $0x28] sm:$0x1]
      %v258 = vld [vmem:[%s246 + $0x30] sm:$0xff]
      %v259 = vld [vmem:[%s246 + $0x38] sm:$0x1]
      %v260 = vld [vmem:[%s246 + $0x40] sm:$0xff]
      %v261 = vld [vmem:[%s246 + $0x48] sm:$0x1]
      %v262 = vld [vmem:[%s246 + $0x50] sm:$0xff]
      %v263 = vld [vmem:[%s246 + $0x58] sm:$0x1]
      %v264 = vld [vmem:[%s246 + $0x60] sm:$0xff]
      %v265 = vld [vmem:[%s246 + $0x68] sm:$0x1]
      %v266 = vld [vmem:[%s246 + $0x70] sm:$0xff]
      %v267 = vld [vmem:[%s246 + $0x78] sm:$0x1]
      %v268 = vld [vmem:[%s246 + $0x80] sm:$0xff]
      %v269 = vld [vmem:[%s246 + $0x88] sm:$0x1]
      %v270 = vld [vmem:[%s246 + $0x90] sm:$0xff]
      %v271 = vld [vmem:[%s246 + $0xa0] sm:$0xff]
      %v272 = vld [vmem:[%s246 + $0xb0] sm:$0xff]
      %v273 = vld [vmem:[%s246 + $0xc0] sm:$0xff]
      %v274 = vld [vmem:[%s246 + $0xd0] sm:$0xff]
      %v275 = vld [vmem:[%s246 + $0xe0] sm:$0xff]
      %v276 = vld [vmem:[%s246 + $0xf0] sm:$0xff]
      %v277 = vld [vmem:[%s246 + $0x100] sm:$0xff]
      %v278 = vld [vmem:[%s246 + $0x110] sm:$0xff]
      %v279 = vld [vmem:[%s246 + $0x120] sm:$0xff]
      %v280 = vld [vmem:[%s246 + $0x128] sm:$0x1]
      %v281 = vld [vmem:[%s246 + $0x130] sm:$0xff]
      %v282 = vld [vmem:[%s246 + $0x138] sm:$0x1]
      %v283 = vld [vmem:[%s246 + $0x140] sm:$0xff]
      %v284 = vld [vmem:[%s246 + $0x148] sm:$0x1]
      %v285 = vld [vmem:[%s246 + $0x150] sm:$0xff]
      %v286 = vld [vmem:[%s246 + $0x158] sm:$0x1]
      %v287 = vld [vmem:[%s246 + $0x160] sm:$0xff]
      %v288 = vld [vmem:[%s246 + $0x168] sm:$0x1]
      %v289 = vld [vmem:[%s246 + $0x170] sm:$0xff]
      %v290 = vld [vmem:[%s246 + $0x178] sm:$0x1]
      %v291 = vld [vmem:[%s246 + $0x180] sm:$0xff]
      %v292 = vld [vmem:[%s246 + $0x188] sm:$0x1]
      %v293 = vld [vmem:[%s246 + $0x190] sm:$0xff]
      %v294 = vld [vmem:[%s246 + $0x198] sm:$0x1]
      %v295 = vld [vmem:[%s246 + $0x1b0] sm:$0xff]
      %v296 = vld [vmem:[%s246 + $0x1c0] sm:$0xff]
      %v297 = vld [vmem:[%s246 + $0x1d0] sm:$0xff]
      %v298 = vld [vmem:[%s246 + $0x1e0] sm:$0xff]
      %v299 = vld [vmem:[%s246 + $0x1f0] sm:$0xff]
      %v300 = vld [vmem:[%s246 + $0x200] sm:$0xff]
      %v301 = vld [vmem:[%s246 + $0x210] sm:$0xff]
      %v302 = vld [vmem:[%s246 + $0x220] sm:$0xff]
      %311 = vrot.lane.b32.xlu0 %v270, 4
      %v312 = vpop.permute.xlu0 %311
      %313 = vrot.lane.b32.xlu0 %v271, 4
      %v314 = vpop.permute.xlu0 %313
      %315 = vrot.lane.b32.xlu0 %v272, 4
      %v316 = vpop.permute.xlu0 %315
      %317 = vrot.lane.b32.xlu0 %v273, 4
      %v318 = vpop.permute.xlu0 %317
      %319 = vrot.lane.b32.xlu0 %v274, 4
      %v320 = vpop.permute.xlu0 %319
      %321 = vrot.lane.b32.xlu0 %v275, 4
      %v322 = vpop.permute.xlu0 %321
      %323 = vrot.lane.b32.xlu0 %v276, 4
      %v324 = vpop.permute.xlu0 %323
      %325 = vrot.lane.b32.xlu0 %v277, 4
      %v326 = vpop.permute.xlu0 %325
      %vm351 = vcmask 1046528
      %v352 = vrot.slane %v252, 1
      %v353 = vrot.slane %v253, 1
      %v354 = vsel %vm351, %v352, %v353
      %v355 = vrot.slane %v254, 1
      %v356 = vrot.slane %v255, 1
      %v357 = vsel %vm351, %v355, %v356
      %v358 = vrot.slane %v256, 1
      %v359 = vrot.slane %v257, 1
      %v360 = vsel %vm351, %v358, %v359
      %v361 = vrot.slane %v258, 1
      %v362 = vrot.slane %v259, 1
      %v363 = vsel %vm351, %v361, %v362
      %v364 = vrot.slane %v260, 1
      %v365 = vrot.slane %v261, 1
      %v366 = vsel %vm351, %v364, %v365
      %v367 = vrot.slane %v262, 1
      %v368 = vrot.slane %v263, 1
      %v369 = vsel %vm351, %v367, %v368
      %v370 = vrot.slane %v264, 1
      %v371 = vrot.slane %v265, 1
      %v372 = vsel %vm351, %v370, %v371
      %v373 = vrot.slane %v266, 1
      %v374 = vrot.slane %v267, 1
      %v375 = vsel %vm351, %v373, %v374
      %376 = vrot.lane.b32.xlu0 %v354, 8
      %v377 = vpop.permute.xlu0 %376
      %378 = vrot.lane.b32.xlu0 %v357, 8
      %v379 = vpop.permute.xlu0 %378
      %380 = vrot.lane.b32.xlu0 %v360, 8
      %v381 = vpop.permute.xlu0 %380
      %382 = vrot.lane.b32.xlu0 %v363, 8
      %v383 = vpop.permute.xlu0 %382
      %384 = vrot.lane.b32.xlu0 %v366, 8
      %v385 = vpop.permute.xlu0 %384
      %386 = vrot.lane.b32.xlu0 %v369, 8
      %v387 = vpop.permute.xlu0 %386
      %388 = vrot.lane.b32.xlu0 %v372, 8
      %v389 = vpop.permute.xlu0 %388
      %390 = vrot.lane.b32.xlu0 %v375, 8
      %v391 = vpop.permute.xlu0 %390
      %408 = vrot.lane.b32.xlu0 %v279, 12
      %v409 = vpop.permute.xlu0 %408
      %410 = vrot.lane.b32.xlu0 %v281, 12
      %v411 = vpop.permute.xlu0 %410
      %412 = vrot.lane.b32.xlu0 %v283, 12
      %v413 = vpop.permute.xlu0 %412
      %414 = vrot.lane.b32.xlu0 %v285, 12
      %v415 = vpop.permute.xlu0 %414
      %416 = vrot.lane.b32.xlu0 %v287, 12
      %v417 = vpop.permute.xlu0 %416
      %418 = vrot.lane.b32.xlu0 %v289, 12
      %v419 = vpop.permute.xlu0 %418
      %420 = vrot.lane.b32.xlu0 %v291, 12
      %v421 = vpop.permute.xlu0 %420
      %422 = vrot.lane.b32.xlu0 %v293, 12
      %v423 = vpop.permute.xlu0 %422
      %440 = vrot.lane.b32.xlu0 %v295, 16
      %v441 = vpop.permute.xlu0 %440
      %442 = vrot.lane.b32.xlu0 %v296, 16
      %v443 = vpop.permute.xlu0 %442
      %444 = vrot.lane.b32.xlu0 %v297, 16
      %v445 = vpop.permute.xlu0 %444
      %446 = vrot.lane.b32.xlu0 %v298, 16
      %v447 = vpop.permute.xlu0 %446
      %448 = vrot.lane.b32.xlu0 %v299, 16
      %v449 = vpop.permute.xlu0 %448
      %450 = vrot.lane.b32.xlu0 %v300, 16
      %v451 = vpop.permute.xlu0 %450
      %452 = vrot.lane.b32.xlu0 %v301, 16
      %v453 = vpop.permute.xlu0 %452
      %454 = vrot.lane.b32.xlu0 %v302, 16
      %v455 = vpop.permute.xlu0 %454
      %v472 = vrot.slane %v279, 1
      %v473 = vrot.slane %v280, 1
      %v474 = vsel %vm351, %v472, %v473
      %v475 = vrot.slane %v281, 1
      %v476 = vrot.slane %v282, 1
      %v477 = vsel %vm351, %v475, %v476
      %v478 = vrot.slane %v283, 1
      %v479 = vrot.slane %v284, 1
      %v480 = vsel %vm351, %v478, %v479
      %v481 = vrot.slane %v285, 1
      %v482 = vrot.slane %v286, 1
      %v483 = vsel %vm351, %v481, %v482
      %v484 = vrot.slane %v287, 1
      %v485 = vrot.slane %v288, 1
      %v486 = vsel %vm351, %v484, %v485
      %v487 = vrot.slane %v289, 1
      %v488 = vrot.slane %v290, 1
      %v489 = vsel %vm351, %v487, %v488
      %v490 = vrot.slane %v291, 1
      %v491 = vrot.slane %v292, 1
      %v492 = vsel %vm351, %v490, %v491
      %v493 = vrot.slane %v293, 1
      %v494 = vrot.slane %v294, 1
      %v495 = vsel %vm351, %v493, %v494
      %496 = vrot.lane.b32.xlu0 %v474, 20
      %v497 = vpop.permute.xlu0 %496
      %498 = vrot.lane.b32.xlu0 %v477, 20
      %v499 = vpop.permute.xlu0 %498
      %500 = vrot.lane.b32.xlu0 %v480, 20
      %v501 = vpop.permute.xlu0 %500
      %502 = vrot.lane.b32.xlu0 %v483, 20
      %v503 = vpop.permute.xlu0 %502
      %504 = vrot.lane.b32.xlu0 %v486, 20
      %v505 = vpop.permute.xlu0 %504
      %506 = vrot.lane.b32.xlu0 %v489, 20
      %v507 = vpop.permute.xlu0 %506
      %508 = vrot.lane.b32.xlu0 %v492, 20
      %v509 = vpop.permute.xlu0 %508
      %510 = vrot.lane.b32.xlu0 %v495, 20
      %v511 = vpop.permute.xlu0 %510
      %521 = vrot.lane.b32.xlu0 %v254, 24
      %v522 = vpop.permute.xlu0 %521
      %523 = vrot.lane.b32.xlu0 %v256, 24
      %v524 = vpop.permute.xlu0 %523
      %525 = vrot.lane.b32.xlu0 %v258, 24
      %v526 = vpop.permute.xlu0 %525
      %527 = vrot.lane.b32.xlu0 %v260, 24
      %v528 = vpop.permute.xlu0 %527
      %529 = vrot.lane.b32.xlu0 %v262, 24
      %v530 = vpop.permute.xlu0 %529
      %531 = vrot.lane.b32.xlu0 %v264, 24
      %v532 = vpop.permute.xlu0 %531
      %533 = vrot.lane.b32.xlu0 %v266, 24
      %v534 = vpop.permute.xlu0 %533
      %535 = vrot.lane.b32.xlu0 %v268, 24
      %v536 = vpop.permute.xlu0 %535
      %546 = vrot.lane.b32.xlu0 %v271, 28
      %v547 = vpop.permute.xlu0 %546
      %548 = vrot.lane.b32.xlu0 %v272, 28
      %v549 = vpop.permute.xlu0 %548
      %550 = vrot.lane.b32.xlu0 %v273, 28
      %v551 = vpop.permute.xlu0 %550
      %552 = vrot.lane.b32.xlu0 %v274, 28
      %v553 = vpop.permute.xlu0 %552
      %554 = vrot.lane.b32.xlu0 %v275, 28
      %v555 = vpop.permute.xlu0 %554
      %556 = vrot.lane.b32.xlu0 %v276, 28
      %v557 = vpop.permute.xlu0 %556
      %558 = vrot.lane.b32.xlu0 %v277, 28
      %v559 = vpop.permute.xlu0 %558
      %560 = vrot.lane.b32.xlu0 %v278, 28
      %v561 = vpop.permute.xlu0 %560
      %v571 = vrot.slane %v268, 1
      %v572 = vrot.slane %v269, 1
      %v573 = vsel %vm351, %v571, %v572
      %574 = vrot.lane.b32.xlu0 %v357, 32
      %v575 = vpop.permute.xlu0 %574
      %576 = vrot.lane.b32.xlu0 %v360, 32
      %v577 = vpop.permute.xlu0 %576
      %578 = vrot.lane.b32.xlu0 %v363, 32
      %v579 = vpop.permute.xlu0 %578
      %580 = vrot.lane.b32.xlu0 %v366, 32
      %v581 = vpop.permute.xlu0 %580
      %582 = vrot.lane.b32.xlu0 %v369, 32
      %v583 = vpop.permute.xlu0 %582
      %584 = vrot.lane.b32.xlu0 %v372, 32
      %v585 = vpop.permute.xlu0 %584
      %586 = vrot.lane.b32.xlu0 %v375, 32
      %v587 = vpop.permute.xlu0 %586
      %588 = vrot.lane.b32.xlu0 %v573, 32
      %v589 = vpop.permute.xlu0 %588
      %vm598 = vcmask 31744
      %v599 = vsel %vm598, %v252, %v312
      %v600 = vsel %vm598, %v254, %v314
      %v601 = vsel %vm598, %v256, %v316
      %v602 = vsel %vm598, %v258, %v318
      %v603 = vsel %vm598, %v260, %v320
      %v604 = vsel %vm598, %v262, %v322
      %v605 = vsel %vm598, %v264, %v324
      %v606 = vsel %vm598, %v266, %v326
      %vm607 = vcmask 64512
      %v608 = vsel %vm607, %v599, %v377
      %v609 = vsel %vm607, %v600, %v379
      %v610 = vsel %vm607, %v601, %v381
      %v611 = vsel %vm607, %v602, %v383
      %v612 = vsel %vm607, %v603, %v385
      %v613 = vsel %vm607, %v604, %v387
      %v614 = vsel %vm607, %v605, %v389
      %v615 = vsel %vm607, %v606, %v391
      %vm616 = vcmask 97280
      %v617 = vsel %vm616, %v608, %v409
      %v618 = vsel %vm616, %v609, %v411
      %v619 = vsel %vm616, %v610, %v413
      %v620 = vsel %vm616, %v611, %v415
      %v621 = vsel %vm616, %v612, %v417
      %v622 = vsel %vm616, %v613, %v419
      %v623 = vsel %vm616, %v614, %v421
      %v624 = vsel %vm616, %v615, %v423
      %vm625 = vcmask 130048
      %v626 = vsel %vm625, %v617, %v441
      %v627 = vsel %vm625, %v618, %v443
      %v628 = vsel %vm625, %v619, %v445
      %v629 = vsel %vm625, %v620, %v447
      %v630 = vsel %vm625, %v621, %v449
      %v631 = vsel %vm625, %v622, %v451
      %v632 = vsel %vm625, %v623, %v453
      %v633 = vsel %vm625, %v624, %v455
      %vm634 = vcmask 162816
      %v635 = vsel %vm634, %v626, %v497
      %v636 = vsel %vm634, %v627, %v499
      %v637 = vsel %vm634, %v628, %v501
      %v638 = vsel %vm634, %v629, %v503
      %v639 = vsel %vm634, %v630, %v505
      %v640 = vsel %vm634, %v631, %v507
      %v641 = vsel %vm634, %v632, %v509
      %v642 = vsel %vm634, %v633, %v511
      %vm643 = vcmask 195584
      %v644 = vsel %vm643, %v635, %v522
      %v645 = vsel %vm643, %v636, %v524
      %v646 = vsel %vm643, %v637, %v526
      %v647 = vsel %vm643, %v638, %v528
      %v648 = vsel %vm643, %v639, %v530
      %v649 = vsel %vm643, %v640, %v532
      %v650 = vsel %vm643, %v641, %v534
      %v651 = vsel %vm643, %v642, %v536
      %vm652 = vcmask 228352
      %v653 = vsel %vm652, %v644, %v547
      %v654 = vsel %vm652, %v645, %v549
      %v655 = vsel %vm652, %v646, %v551
      %v656 = vsel %vm652, %v647, %v553
      %v657 = vsel %vm652, %v648, %v555
      %v658 = vsel %vm652, %v649, %v557
      %v659 = vsel %vm652, %v650, %v559
      %v660 = vsel %vm652, %v651, %v561
      %vm661 = vcmask 261120
      %v662 = vsel %vm661, %v653, %v575
      %v663 = vsel %vm661, %v654, %v577
      %v664 = vsel %vm661, %v655, %v579
      %v665 = vsel %vm661, %v656, %v581
      %v666 = vsel %vm661, %v657, %v583
      %v667 = vsel %vm661, %v658, %v585
      %v668 = vsel %vm661, %v659, %v587
      %v669 = vsel %vm661, %v660, %v589
      %v670 = vld [vmem:[%s1] sm:$0xff]
      %v671 = vld [vmem:[%s1 + $0x8] sm:$0xff]
      %v672 = vld [vmem:[%s1 + $0x10] sm:$0xff]
      %v673 = vld [vmem:[%s1 + $0x18] sm:$0xff]
      %v674 = vld [vmem:[%s1 + $0x20] sm:$0xf]
      %v675 = vld [vmem:[%s2] sm:$0x1]
      %v677 = vperm.slane %v675, 0
      %vm679 = vcmask 293888
      %v681 = vsel %vm679, %v662, 0
      %v684 = vsel %vm679, %v663, 0
      %v687 = vsel %vm679, %v664, 0
      %v690 = vsel %vm679, %v665, 0
      %v693 = vsel %vm679, %v666, 0
      %v696 = vsel %vm679, %v667, 0
      %v699 = vsel %vm679, %v668, 0
      %v702 = vsel %vm679, %v669, 0
      %vm704 = vcmask 1043456
      %v706 = vsel %vm704, %v674, 0
      %708 = vmatpush.msra.mxu0 0.0
      %709 = vmatpush.msra.mxu0 0.0
      %710 = vmatpush.msra.mxu0 0.0
      %711 = vmatpush.msra.mxu0 0.0
      %712 = vmatpush.msra.mxu0 0.0
      %713 = vmatpush.msra.mxu0 0.0
      %714 = vmatpush.msra.mxu0 0.0
      %715 = vmatpush.msra.mxu0 0.0
      %716 = vmatpush.msra.mxu0 0.0
      %717 = vmatpush.msra.mxu0 0.0
      %718 = vmatpush.msra.mxu0 0.0
      %719 = vmatpush.msra.mxu0 %v706
      %720 = vmatpush.msra.mxu0 %v673
      %721 = vmatpush.msra.mxu0 %v672
      %722 = vmatpush.msra.mxu0 %v671
      %723 = vmatpush.msra.mxu0 %v670
      %724 = vmatmul.f32.gmra.mxu0 %v681
      %v725 = vpop.f32.mrf.mxu0
      %v726 = vadd.f32 %v677, %v725
      %727 = vmatmul.f32.gmra.mxu0 %v684
      %v728 = vpop.f32.mrf.mxu0
      %v729 = vadd.f32 %v677, %v728
      %730 = vmatmul.f32.gmra.mxu0 %v687
      %v731 = vpop.f32.mrf.mxu0
      %v732 = vadd.f32 %v677, %v731
      %733 = vmatmul.f32.gmra.mxu0 %v690
      %v734 = vpop.f32.mrf.mxu0
      %v735 = vadd.f32 %v677, %v734
      %736 = vmatmul.f32.gmra.mxu0 %v693
      %v737 = vpop.f32.mrf.mxu0
      %v738 = vadd.f32 %v677, %v737
      %739 = vmatmul.f32.gmra.mxu0 %v696
      %v740 = vpop.f32.mrf.mxu0
      %v741 = vadd.f32 %v677, %v740
      %742 = vmatmul.f32.gmra.mxu0 %v699
      %v743 = vpop.f32.mrf.mxu0
      %v744 = vadd.f32 %v677, %v743
      %745 = vmatmul.f32.gmra.mxu0 %v702
      %v746 = vpop.f32.mrf.mxu0
      %v747 = vadd.f32 %v677, %v746
      %748 = vdwg.mxu0
      %v749 = vmax.f32 %v726, 0.0
      %v750 = vmax.f32 %v729, 0.0
      %v751 = vmax.f32 %v732, 0.0
      %v752 = vmax.f32 %v735, 0.0
      %v753 = vmax.f32 %v738, 0.0
      %v754 = vmax.f32 %v741, 0.0
      %v755 = vmax.f32 %v744, 0.0
      %v756 = vmax.f32 %v747, 0.0
      %v757 = vld [vmem:[%s3] sm:$0xff]
      %v758 = vld [vmem:[%s3 + $0x8] sm:$0xff]
      %v759 = vld [vmem:[%s3 + $0x10] sm:$0xff]
      %v760 = vld [vmem:[%s3 + $0x18] sm:$0xff]
      %v761 = vld [vmem:[%s3 + $0x20] sm:$0xff]
      %v762 = vld [vmem:[%s3 + $0x28] sm:$0xff]
      %v763 = vld [vmem:[%s3 + $0x30] sm:$0xff]
      %v764 = vld [vmem:[%s3 + $0x38] sm:$0xff]
      %v765 = vld [vmem:[%s3 + $0x40] sm:$0xff]
      %v766 = vld [vmem:[%s3 + $0x48] sm:$0xff]
      %v767 = vld [vmem:[%s3 + $0x50] sm:$0xff]
      %v768 = vld [vmem:[%s3 + $0x58] sm:$0xff]
      %v769 = vld [vmem:[%s3 + $0x60] sm:$0xff]
      %v770 = vld [vmem:[%s3 + $0x68] sm:$0xff]
      %v771 = vld [vmem:[%s3 + $0x70] sm:$0xff]
      %v772 = vld [vmem:[%s3 + $0x78] sm:$0xff]
      %v773 = vld [vmem:[%s4] sm:$0x1]
      %v775 = vperm.slane %v773, 0
      %777 = vmatpush.msra.mxu0 %v772
      %778 = vmatpush.msra.mxu0 %v771
      %779 = vmatpush.msra.mxu0 %v770
      %780 = vmatpush.msra.mxu0 %v769
      %781 = vmatpush.msra.mxu0 %v768
      %782 = vmatpush.msra.mxu0 %v767
      %783 = vmatpush.msra.mxu0 %v766
      %784 = vmatpush.msra.mxu0 %v765
      %785 = vmatpush.msra.mxu0 %v764
      %786 = vmatpush.msra.mxu0 %v763
      %787 = vmatpush.msra.mxu0 %v762
      %788 = vmatpush.msra.mxu0 %v761
      %789 = vmatpush.msra.mxu0 %v760
      %790 = vmatpush.msra.mxu0 %v759
      %791 = vmatpush.msra.mxu0 %v758
      %792 = vmatpush.msra.mxu0 %v757
      %793 = vmatmul.f32.gmra.mxu0 %v749
      %v794 = vpop.f32.mrf.mxu0
      %v795 = vadd.f32 %v775, %v794
      %796 = vmatmul.f32.gmra.mxu0 %v750
      %v797 = vpop.f32.mrf.mxu0
      %v798 = vadd.f32 %v775, %v797
      %799 = vmatmul.f32.gmra.mxu0 %v751
      %v800 = vpop.f32.mrf.mxu0
      %v801 = vadd.f32 %v775, %v800
      %802 = vmatmul.f32.gmra.mxu0 %v752
      %v803 = vpop.f32.mrf.mxu0
      %v804 = vadd.f32 %v775, %v803
      %805 = vmatmul.f32.gmra.mxu0 %v753
      %v806 = vpop.f32.mrf.mxu0
      %v807 = vadd.f32 %v775, %v806
      %808 = vmatmul.f32.gmra.mxu0 %v754
      %v809 = vpop.f32.mrf.mxu0
      %v810 = vadd.f32 %v775, %v809
      %811 = vmatmul.f32.gmra.mxu0 %v755
      %v812 = vpop.f32.mrf.mxu0
      %v813 = vadd.f32 %v775, %v812
      %814 = vmatmul.f32.gmra.mxu0 %v756
      %v815 = vpop.f32.mrf.mxu0
      %v816 = vadd.f32 %v775, %v815
      %817 = vdwg.mxu0
      %v818 = vld [vmem:[%s5] sm:$0xff]
      %v819 = vld [vmem:[%s5 + $0x8] sm:$0xff]
      %v820 = vld [vmem:[%s5 + $0x10] sm:$0xff]
      %v821 = vld [vmem:[%s5 + $0x18] sm:$0xff]
      %v822 = vld [vmem:[%s5 + $0x20] sm:$0xff]
      %v823 = vld [vmem:[%s5 + $0x28] sm:$0xff]
      %v824 = vld [vmem:[%s5 + $0x30] sm:$0xff]
      %v825 = vld [vmem:[%s5 + $0x38] sm:$0xff]
      %v826 = vld [vmem:[%s5 + $0x40] sm:$0xff]
      %v827 = vld [vmem:[%s5 + $0x48] sm:$0xff]
      %v828 = vld [vmem:[%s5 + $0x50] sm:$0xff]
      %v829 = vld [vmem:[%s5 + $0x58] sm:$0xff]
      %v830 = vld [vmem:[%s5 + $0x60] sm:$0xff]
      %v831 = vld [vmem:[%s5 + $0x68] sm:$0xff]
      %v832 = vld [vmem:[%s5 + $0x70] sm:$0xff]
      %v833 = vld [vmem:[%s5 + $0x78] sm:$0xff]
      %v834 = vld [vmem:[%s5 + $0x80] sm:$0xff]
      %v835 = vld [vmem:[%s5 + $0x88] sm:$0xff]
      %v836 = vld [vmem:[%s5 + $0x90] sm:$0xff]
      %v837 = vld [vmem:[%s5 + $0x98] sm:$0xff]
      %v838 = vld [vmem:[%s5 + $0xa0] sm:$0xff]
      %v839 = vld [vmem:[%s5 + $0xa8] sm:$0xff]
      %v840 = vld [vmem:[%s5 + $0xb0] sm:$0xff]
      %v841 = vld [vmem:[%s5 + $0xb8] sm:$0xff]
      %v842 = vld [vmem:[%s5 + $0xc0] sm:$0xff]
      %v843 = vld [vmem:[%s5 + $0xc8] sm:$0xff]
      %v844 = vld [vmem:[%s5 + $0xd0] sm:$0xff]
      %v845 = vld [vmem:[%s5 + $0xd8] sm:$0xff]
      %v846 = vld [vmem:[%s5 + $0xe0] sm:$0xff]
      %v847 = vld [vmem:[%s5 + $0xe8] sm:$0xff]
      %v848 = vld [vmem:[%s5 + $0xf0] sm:$0xff]
      %v849 = vld [vmem:[%s5 + $0xf8] sm:$0xff]
      %vm850 = vcmask 523264
      %v852 = vsel %vm850, %v818, 0
      %v855 = vsel %vm850, %v819, 0
      %v858 = vsel %vm850, %v820, 0
      %v861 = vsel %vm850, %v821, 0
      %v864 = vsel %vm850, %v822, 0
      %v867 = vsel %vm850, %v823, 0
      %v870 = vsel %vm850, %v824, 0
      %v873 = vsel %vm850, %v825, 0
      %v876 = vsel %vm850, %v826, 0
      %v879 = vsel %vm850, %v827, 0
      %v882 = vsel %vm850, %v828, 0
      %v885 = vsel %vm850, %v829, 0
      %v888 = vsel %vm850, %v830, 0
      %v891 = vsel %vm850, %v831, 0
      %v894 = vsel %vm850, %v832, 0
      %v897 = vsel %vm850, %v833, 0
      %v900 = vsel %vm850, %v834, 0
      %v903 = vsel %vm850, %v835, 0
      %v906 = vsel %vm850, %v836, 0
      %v909 = vsel %vm850, %v837, 0
      %v912 = vsel %vm850, %v838, 0
      %v915 = vsel %vm850, %v839, 0
      %v918 = vsel %vm850, %v840, 0
      %v921 = vsel %vm850, %v841, 0
      %v924 = vsel %vm850, %v842, 0
      %v927 = vsel %vm850, %v843, 0
      %v930 = vsel %vm850, %v844, 0
      %v933 = vsel %vm850, %v845, 0
      %v936 = vsel %vm850, %v846, 0
      %v939 = vsel %vm850, %v847, 0
      %v942 = vsel %vm850, %v848, 0
      %v945 = vsel %vm850, %v849, 0
      %947 = vmatpush.msra.mxu0 0.0
      %948 = vmatpush.msra.mxu0 0.0
      %949 = vmatpush.msra.mxu0 0.0
      %950 = vmatpush.msra.mxu0 0.0
      %951 = vmatpush.msra.mxu0 0.0
      %952 = vmatpush.msra.mxu0 0.0
      %953 = vmatpush.msra.mxu0 0.0
      %954 = vmatpush.msra.mxu0 0.0
      %955 = vmatpush.msra.mxu0 %v816
      %956 = vmatpush.msra.mxu0 %v813
      %957 = vmatpush.msra.mxu0 %v810
      %958 = vmatpush.msra.mxu0 %v807
      %959 = vmatpush.msra.mxu0 %v804
      %960 = vmatpush.msra.mxu0 %v801
      %961 = vmatpush.msra.mxu0 %v798
      %962 = vmatpush.msra.mxu0 %v795
      %963 = vmatmul.f32.gmra.mxu0 %v852
      %v964 = vpop.f32.mrf.mxu0
      %v965 = vadd.f32 0.0, %v964
      %966 = vmatmul.f32.gmra.mxu0 %v855
      %v967 = vpop.f32.mrf.mxu0
      %v968 = vadd.f32 0.0, %v967
      %969 = vmatmul.f32.gmra.mxu0 %v858
      %v970 = vpop.f32.mrf.mxu0
      %v971 = vadd.f32 0.0, %v970
      %972 = vmatmul.f32.gmra.mxu0 %v861
      %v973 = vpop.f32.mrf.mxu0
      %v974 = vadd.f32 0.0, %v973
      %975 = vmatmul.f32.gmra.mxu0 %v864
      %v976 = vpop.f32.mrf.mxu0
      %v977 = vadd.f32 0.0, %v976
      %978 = vmatmul.f32.gmra.mxu0 %v867
      %v979 = vpop.f32.mrf.mxu0
      %v980 = vadd.f32 0.0, %v979
      %981 = vmatmul.f32.gmra.mxu0 %v870
      %v982 = vpop.f32.mrf.mxu0
      %v983 = vadd.f32 0.0, %v982
      %984 = vmatmul.f32.gmra.mxu0 %v873
      %v985 = vpop.f32.mrf.mxu0
      %v986 = vadd.f32 0.0, %v985
      %987 = vmatmul.f32.gmra.mxu0 %v876
      %v988 = vpop.f32.mrf.mxu0
      %v989 = vadd.f32 0.0, %v988
      %990 = vmatmul.f32.gmra.mxu0 %v879
      %v991 = vpop.f32.mrf.mxu0
      %v992 = vadd.f32 0.0, %v991
      %993 = vmatmul.f32.gmra.mxu0 %v882
      %v994 = vpop.f32.mrf.mxu0
      %v995 = vadd.f32 0.0, %v994
      %996 = vmatmul.f32.gmra.mxu0 %v885
      %v997 = vpop.f32.mrf.mxu0
      %v998 = vadd.f32 0.0, %v997
      %999 = vmatmul.f32.gmra.mxu0 %v888
      %v1000 = vpop.f32.mrf.mxu0
      %v1001 = vadd.f32 0.0, %v1000
      %1002 = vmatmul.f32.gmra.mxu0 %v891
      %v1003 = vpop.f32.mrf.mxu0
      %v1004 = vadd.f32 0.0, %v1003
      %1005 = vmatmul.f32.gmra.mxu0 %v894
      %v1006 = vpop.f32.mrf.mxu0
      %v1007 = vadd.f32 0.0, %v1006
      %1008 = vmatmul.f32.gmra.mxu0 %v897
      %v1009 = vpop.f32.mrf.mxu0
      %v1010 = vadd.f32 0.0, %v1009
      %1011 = vmatmul.f32.gmra.mxu0 %v900
      %v1012 = vpop.f32.mrf.mxu0
      %v1013 = vadd.f32 0.0, %v1012
      %1014 = vmatmul.f32.gmra.mxu0 %v903
      %v1015 = vpop.f32.mrf.mxu0
      %v1016 = vadd.f32 0.0, %v1015
      %1017 = vmatmul.f32.gmra.mxu0 %v906
      %v1018 = vpop.f32.mrf.mxu0
      %v1019 = vadd.f32 0.0, %v1018
      %1020 = vmatmul.f32.gmra.mxu0 %v909
      %v1021 = vpop.f32.mrf.mxu0
      %v1022 = vadd.f32 0.0, %v1021
      %1023 = vmatmul.f32.gmra.mxu0 %v912
      %v1024 = vpop.f32.mrf.mxu0
      %v1025 = vadd.f32 0.0, %v1024
      %1026 = vmatmul.f32.gmra.mxu0 %v915
      %v1027 = vpop.f32.mrf.mxu0
      %v1028 = vadd.f32 0.0, %v1027
      %1029 = vmatmul.f32.gmra.mxu0 %v918
      %v1030 = vpop.f32.mrf.mxu0
      %v1031 = vadd.f32 0.0, %v1030
      %1032 = vmatmul.f32.gmra.mxu0 %v921
      %v1033 = vpop.f32.mrf.mxu0
      %v1034 = vadd.f32 0.0, %v1033
      %1035 = vmatmul.f32.gmra.mxu0 %v924
      %v1036 = vpop.f32.mrf.mxu0
      %v1037 = vadd.f32 0.0, %v1036
      %1038 = vmatmul.f32.gmra.mxu0 %v927
      %v1039 = vpop.f32.mrf.mxu0
      %v1040 = vadd.f32 0.0, %v1039
      %1041 = vmatmul.f32.gmra.mxu0 %v930
      %v1042 = vpop.f32.mrf.mxu0
      %v1043 = vadd.f32 0.0, %v1042
      %1044 = vmatmul.f32.gmra.mxu0 %v933
      %v1045 = vpop.f32.mrf.mxu0
      %v1046 = vadd.f32 0.0, %v1045
      %1047 = vmatmul.f32.gmra.mxu0 %v936
      %v1048 = vpop.f32.mrf.mxu0
      %v1049 = vadd.f32 0.0, %v1048
      %1050 = vmatmul.f32.gmra.mxu0 %v939
      %v1051 = vpop.f32.mrf.mxu0
      %v1052 = vadd.f32 0.0, %v1051
      %1053 = vmatmul.f32.gmra.mxu0 %v942
      %v1054 = vpop.f32.mrf.mxu0
      %v1055 = vadd.f32 0.0, %v1054
      %1056 = vmatmul.f32.gmra.mxu0 %v945
      %v1057 = vpop.f32.mrf.mxu0
      %v1058 = vadd.f32 0.0, %v1057
      %1059 = vdwg.mxu0
      %1060 = vst [vmem:[%s251] sm:$0xff] %v965
      %1061 = vst [vmem:[%s251 + $0x8] sm:$0xff] %v968
      %1062 = vst [vmem:[%s251 + $0x10] sm:$0xff] %v971
      %1063 = vst [vmem:[%s251 + $0x18] sm:$0xff] %v974
      %1064 = vst [vmem:[%s251 + $0x20] sm:$0xff] %v977
      %1065 = vst [vmem:[%s251 + $0x28] sm:$0xff] %v980
      %1066 = vst [vmem:[%s251 + $0x30] sm:$0xff] %v983
      %1067 = vst [vmem:[%s251 + $0x38] sm:$0xff] %v986
      %1068 = vst [vmem:[%s251 + $0x40] sm:$0xff] %v989
      %1069 = vst [vmem:[%s251 + $0x48] sm:$0xff] %v992
      %1070 = vst [vmem:[%s251 + $0x50] sm:$0xff] %v995
      %1071 = vst [vmem:[%s251 + $0x58] sm:$0xff] %v998
      %1072 = vst [vmem:[%s251 + $0x60] sm:$0xff] %v1001
      %1073 = vst [vmem:[%s251 + $0x68] sm:$0xff] %v1004
      %1074 = vst [vmem:[%s251 + $0x70] sm:$0xff] %v1007
      %1075 = vst [vmem:[%s251 + $0x78] sm:$0xff] %v1010
      %1076 = vst [vmem:[%s251 + $0x80] sm:$0xff] %v1013
      %1077 = vst [vmem:[%s251 + $0x88] sm:$0xff] %v1016
      %1078 = vst [vmem:[%s251 + $0x90] sm:$0xff] %v1019
      %1079 = vst [vmem:[%s251 + $0x98] sm:$0xff] %v1022
      %1080 = vst [vmem:[%s251 + $0xa0] sm:$0xff] %v1025
      %1081 = vst [vmem:[%s251 + $0xa8] sm:$0xff] %v1028
      %1082 = vst [vmem:[%s251 + $0xb0] sm:$0xff] %v1031
      %1083 = vst [vmem:[%s251 + $0xb8] sm:$0xff] %v1034
      %1084 = vst [vmem:[%s251 + $0xc0] sm:$0xff] %v1037
      %1085 = vst [vmem:[%s251 + $0xc8] sm:$0xff] %v1040
      %1086 = vst [vmem:[%s251 + $0xd0] sm:$0xff] %v1043
      %1087 = vst [vmem:[%s251 + $0xd8] sm:$0xff] %v1046
      %1088 = vst [vmem:[%s251 + $0xe0] sm:$0xff] %v1049
      %1089 = vst [vmem:[%s251 + $0xe8] sm:$0xff] %v1052
      %1090 = vst [vmem:[%s251 + $0xf0] sm:$0xff] %v1055
      %1091 = vst [vmem:[%s251 + $0xf8] sm:$0xff] %v1058
      %p1092 = scmp.lt.s32.totalorder %s17, 1
      %s1093 = scalar_select %p1092, %s17, 1
      %s1094 = smul.addr %s1093, 32
      %s1095 = smul.addr %s1094, 8
      %s1096 = scalar_lea.vmem %s6, %s1095
      // Predicated region
      $region45: #{deeplabv3_forward.1} parent=43 // pred_check
        %p1097 = pneg %p166
      $region46: #{deeplabv3_forward.1} parent=43 // pred_check_branch
        %1099 = sbr.rel (%p1097) target = $region48
      $region47: #{deeplabv3_forward.1} parent=43 // pred_region
        _
      $region48: #{deeplabv3_forward.1} parent=43 // pred_fallthru
        _
    $region44: #{deeplabv3_forward.1} parent=5 // pred_fallthru
      _
    %p1100 = scmp.le.s32.totalorder 2, %s12
    // Predicated region
    $region49: #{deeplabv3_forward.1} parent=5 // pred_check
      %p1101 = pneg %p1100
    $region50: #{deeplabv3_forward.1} parent=5 // pred_check_branch
      %1103 = sbr.rel (%p1101) target = $region52
    $region51: #{deeplabv3_forward.1} parent=5 // pred_region
      %s1104 = ssub.s32 %s12, 2
      // Predicated region
      $region53: #{deeplabv3_forward.1} parent=51 // pred_check
        %p1105 = pneg %p172
      $region54: #{deeplabv3_forward.1} parent=51 // pred_check_branch
        %1107 = sbr.rel (%p1105) target = $region56
      $region55: #{deeplabv3_forward.1} parent=51 // pred_region
        %p1108 = scmp.lt.s32.totalorder %s18, 1
        %s1109 = scalar_select %p1108, %s18, 1
        %s1110 = smul.addr %s1109, 32
        %s1111 = smul.addr %s1110, 8
        %s1112 = scalar_lea.vmem %s6, %s1111
      $region56: #{deeplabv3_forward.1} parent=51 // pred_fallthru
        _
    $region52: #{deeplabv3_forward.1} parent=5 // pred_fallthru
      _
  $region6: #{deeplabv3_forward.1} parent=0 // loop_footer
    %s16 = sadd.s32 1, %s12
  $region7: #{deeplabv3_forward.1} parent=0 // loop_footer_branch
    %11 = sbr.rel target = $region3
  $region8: #{deeplabv3_forward.1} parent=0 // loop_exit
    _

</llo_original>
